<compile_context>
chip_gen: v7x
topology: tpu7x:2x2x1
jax: 0.10.0
libtpu: 0.0.40
codegen_flags: <defaults>
</compile_context>

<pallas_src>
import jax
import jax.numpy as jnp
from jax.experimental import pallas as pl
from jax.experimental.pallas import tpu as pltpu

H1, H2, H3, OUT = 128, 64, 64, 2
OUT_PAD = 128  # lane-dense padded output width


def _round_up(n, m):
    return ((n + m - 1) // m) * m


def attack_net_kernel(x_ref,
                      w1_ref, b1_ref,
                      w2_ref, b2_ref,
                      w3_ref, b3_ref,
                      w4_ref, b4_ref,
                      o_ref):
    # MXU matmuls with f32 accumulation; bias broadcast + ReLU ride in spare VALU slots.
    cdt = w1_ref.dtype  # bf16 compute dtype for MXU operands
    h = jnp.dot(x_ref[...], w1_ref[...], preferred_element_type=jnp.float32) + b1_ref[...]
    h = jnp.maximum(h, 0.0)                                   # ReLU (Dropout(0.3) == identity, eval)
    h = jnp.dot(h.astype(cdt), w2_ref[...], preferred_element_type=jnp.float32) + b2_ref[...]
    h = jnp.maximum(h, 0.0)                                   # ReLU (Dropout(0.2) == identity, eval)
    h = jnp.dot(h.astype(cdt), w3_ref[...], preferred_element_type=jnp.float32) + b3_ref[...]
    h = jnp.maximum(h, 0.0)
    o_ref[...] = (jnp.dot(h.astype(cdt), w4_ref[...], preferred_element_type=jnp.float32)
                  + b4_ref[...]).astype(o_ref.dtype)


def attack_network(x, params, *, tile_b=1024, compute_dtype=jnp.bfloat16):
    """x: (B, in_features) float32. params: dict of w1..w4 (fan_in, fan_out), b1..b4 (1, fan_out)."""
    B, F = x.shape

    # Batch tile: cap at what's needed, keep it a multiple of 16 (bf16 sublane packing).
    tile_b = _round_up(max(16, min(tile_b, _round_up(B, 16))), 16)
    Bp = _round_up(B, tile_b)
    if Bp != B:
        x = jnp.pad(x, ((0, Bp - B), (0, 0)))

    # bf16 operands (halves x's HBM traffic, 2x MXU rate); biases stay f32.
    xc = x.astype(compute_dtype)
    w1 = params["w1"].astype(compute_dtype)
    w2 = params["w2"].astype(compute_dtype)
    w3 = params["w3"].astype(compute_dtype)
    # Zero-pad the final layer to a lane-dense 128-wide output slab.
    w4 = jnp.zeros((H3, OUT_PAD), compute_dtype).at[:, :OUT].set(
        params["w4"].astype(compute_dtype))
    b1, b2, b3 = params["b1"], params["b2"], params["b3"]
    b4 = jnp.zeros((1, OUT_PAD), jnp.float32).at[:, :OUT].set(params["b4"])

    grid = (Bp // tile_b,)
    resident = lambda shape: pl.BlockSpec(shape, lambda i: (0, 0))  # stays in VMEM every step

    out = pl.pallas_call(
        attack_net_kernel,
        out_shape=jax.ShapeDtypeStruct((Bp, OUT_PAD), jnp.float32),
        grid=grid,
        in_specs=[
            pl.BlockSpec((tile_b, F), lambda i: (i, 0)),
            resident(w1.shape), resident(b1.shape),
            resident(w2.shape), resident(b2.shape),
            resident(w3.shape), resident(b3.shape),
            resident(w4.shape), resident(b4.shape),
        ],
        out_specs=pl.BlockSpec((tile_b, OUT_PAD), lambda i: (i, 0)),
        compiler_params=pltpu.CompilerParams(
            dimension_semantics=("parallel",)),
    )(xc, w1, b1, w2, b2, w3, b3, w4, b4)

    return out[:B, :OUT]


def init_params(key, in_features):
    """Deterministic init mimicking PyTorch nn.Linear default (uniform +/- 1/sqrt(fan_in))."""
    dims = [(in_features, H1), (H1, H2), (H2, H3), (H3, OUT)]
    params = {}
    for i, (fan_in, fan_out) in enumerate(dims, start=1):
        key, kw, kb = jax.random.split(key, 3)
        bound = 1.0 / jnp.sqrt(fan_in)
        params[f"w{i}"] = jax.random.uniform(
            kw, (fan_in, fan_out), jnp.float32, minval=-bound, maxval=bound)
        # keep bias 2D (1, fan_out) so it broadcasts cleanly on TPU lanes
        params[f"b{i}"] = jax.random.uniform(
            kb, (1, fan_out), jnp.float32, minval=-bound, maxval=bound)
    return params


def reference_forward(x, params, compute_dtype=jnp.bfloat16):
    """Pure-JAX reference with identical dtype handling (bf16 operands, f32 accumulation)."""
    f32 = jnp.float32
    h = jnp.maximum(jnp.dot(x.astype(compute_dtype), params["w1"].astype(compute_dtype),
                            preferred_element_type=f32) + params["b1"], 0.0)
    h = jnp.maximum(jnp.dot(h.astype(compute_dtype), params["w2"].astype(compute_dtype),
                            preferred_element_type=f32) + params["b2"], 0.0)
    h = jnp.maximum(jnp.dot(h.astype(compute_dtype), params["w3"].astype(compute_dtype),
                            preferred_element_type=f32) + params["b3"], 0.0)
    return jnp.dot(h.astype(compute_dtype), params["w4"].astype(compute_dtype),
                   preferred_element_type=f32) + params["b4"]


if __name__ == "__main__":
    key = jax.random.PRNGKey(0)
    k_x, k_p, k_x2 = jax.random.split(key, 3)

    B, in_features = 8, 32
    params = init_params(k_p, in_features)

    # Small demo batch (single grid step after padding to the 16-row minimum tile).
    x = jax.random.normal(k_x, (B, in_features), dtype=jnp.float32)
    out = jax.block_until_ready(attack_network(x, params))
    ref = reference_forward(x, params)
    assert out.shape == (B, OUT), out.shape
    assert jnp.allclose(out, ref, atol=1e-4, rtol=1e-4), "mismatch vs pure-JAX reference (small B)"

    # Exercise the multi-step batch grid + padding path (B not a multiple of the tile).
    B2 = 200
    x2 = jax.random.normal(k_x2, (B2, in_features), dtype=jnp.float32)
    out2 = jax.block_until_ready(attack_network(x2, params, tile_b=64))
    ref2 = reference_forward(x2, params)
    assert out2.shape == (B2, OUT), out2.shape
    assert jnp.allclose(out2, ref2, atol=1e-4, rtol=1e-4), "mismatch vs pure-JAX reference (tiled B)"

    print("KERNEL_OK")
</pallas_src>

<mosaic_0001>
module attributes {stable_mosaic.version = 11 : i64} {
  func.func @attack_net_kernel(%arg0: i32, %arg1: memref<16x32xbf16, #tpu.memory_space<vmem>>, %arg2: memref<32x128xbf16, #tpu.memory_space<vmem>>, %arg3: memref<1x128xf32, #tpu.memory_space<vmem>>, %arg4: memref<128x64xbf16, #tpu.memory_space<vmem>>, %arg5: memref<1x64xf32, #tpu.memory_space<vmem>>, %arg6: memref<64x64xbf16, #tpu.memory_space<vmem>>, %arg7: memref<1x64xf32, #tpu.memory_space<vmem>>, %arg8: memref<64x128xbf16, #tpu.memory_space<vmem>>, %arg9: memref<1x128xf32, #tpu.memory_space<vmem>>, %arg10: memref<16x128xf32, #tpu.memory_space<vmem>>) attributes {dimension_semantics = [#tpu.dimension_semantics<parallel>], iteration_bounds = array<i64: 1>, scalar_prefetch = 0 : i64, scratch_operands = 0 : i64, tpu.core_type = #tpu.core_type<tc>, window_params = [{transform_indices = @transform_0, window_bounds = array<i64: 16, 32>}, {pipeline_mode = #tpu.pipeline_mode<synchronous>, transform_indices = @transform_1, window_bounds = array<i64: 32, 128>}, {pipeline_mode = #tpu.pipeline_mode<synchronous>, transform_indices = @transform_2, window_bounds = array<i64: 1, 128>}, {pipeline_mode = #tpu.pipeline_mode<synchronous>, transform_indices = @transform_3, window_bounds = array<i64: 128, 64>}, {pipeline_mode = #tpu.pipeline_mode<synchronous>, transform_indices = @transform_4, window_bounds = array<i64: 1, 64>}, {pipeline_mode = #tpu.pipeline_mode<synchronous>, transform_indices = @transform_5, window_bounds = array<i64: 64, 64>}, {pipeline_mode = #tpu.pipeline_mode<synchronous>, transform_indices = @transform_6, window_bounds = array<i64: 1, 64>}, {pipeline_mode = #tpu.pipeline_mode<synchronous>, transform_indices = @transform_7, window_bounds = array<i64: 64, 128>}, {pipeline_mode = #tpu.pipeline_mode<synchronous>, transform_indices = @transform_8, window_bounds = array<i64: 1, 128>}, {transform_indices = @transform_9, window_bounds = array<i64: 16, 128>}]} {
    %c0 = arith.constant 0 : index
    %c0_0 = arith.constant 0 : index
    %0 = vector.load %arg1[%c0, %c0_0] : memref<16x32xbf16, #tpu.memory_space<vmem>>, vector<16x32xbf16>
    %c0_1 = arith.constant 0 : index
    %c0_2 = arith.constant 0 : index
    %1 = vector.load %arg2[%c0_1, %c0_2] : memref<32x128xbf16, #tpu.memory_space<vmem>>, vector<32x128xbf16>
    %cst = arith.constant dense<0.000000e+00> : vector<16x128xf32>
    %2 = tpu.matmul %0, %1, %cst {dimension_numbers = #tpu.dot_dimension_numbers<[1], [0], [0], [1], [0, 0, 1, 1], [], []>} : vector<16x32xbf16>, vector<32x128xbf16>, vector<16x128xf32> -> vector<16x128xf32>
    %c0_3 = arith.constant 0 : index
    %c0_4 = arith.constant 0 : index
    %3 = vector.load %arg3[%c0_3, %c0_4] : memref<1x128xf32, #tpu.memory_space<vmem>>, vector<1x128xf32>
    %4 = vector.broadcast %3 : vector<1x128xf32> to vector<16x128xf32>
    %5 = arith.addf %2, %4 : vector<16x128xf32>
    %cst_5 = arith.constant 0.000000e+00 : f32
    %6 = vector.broadcast %cst_5 : f32 to vector<16x128xf32>
    %7 = arith.maximumf %5, %6 : vector<16x128xf32>
    %8 = arith.truncf %7 : vector<16x128xf32> to vector<16x128xbf16>
    %c0_6 = arith.constant 0 : index
    %c0_7 = arith.constant 0 : index
    %9 = vector.load %arg4[%c0_6, %c0_7] : memref<128x64xbf16, #tpu.memory_space<vmem>>, vector<128x64xbf16>
    %cst_8 = arith.constant dense<0.000000e+00> : vector<16x64xf32>
    %10 = tpu.matmul %8, %9, %cst_8 {dimension_numbers = #tpu.dot_dimension_numbers<[1], [0], [0], [1], [0, 0, 1, 1], [], []>} : vector<16x128xbf16>, vector<128x64xbf16>, vector<16x64xf32> -> vector<16x64xf32>
    %c0_9 = arith.constant 0 : index
    %c0_10 = arith.constant 0 : index
    %11 = vector.load %arg5[%c0_9, %c0_10] : memref<1x64xf32, #tpu.memory_space<vmem>>, vector<1x64xf32>
    %12 = vector.broadcast %11 : vector<1x64xf32> to vector<16x64xf32>
    %13 = arith.addf %10, %12 : vector<16x64xf32>
    %cst_11 = arith.constant 0.000000e+00 : f32
    %14 = vector.broadcast %cst_11 : f32 to vector<16x64xf32>
    %15 = arith.maximumf %13, %14 : vector<16x64xf32>
    %16 = arith.truncf %15 : vector<16x64xf32> to vector<16x64xbf16>
    %c0_12 = arith.constant 0 : index
    %c0_13 = arith.constant 0 : index
    %17 = vector.load %arg6[%c0_12, %c0_13] : memref<64x64xbf16, #tpu.memory_space<vmem>>, vector<64x64xbf16>
    %cst_14 = arith.constant dense<0.000000e+00> : vector<16x64xf32>
    %18 = tpu.matmul %16, %17, %cst_14 {dimension_numbers = #tpu.dot_dimension_numbers<[1], [0], [0], [1], [0, 0, 1, 1], [], []>} : vector<16x64xbf16>, vector<64x64xbf16>, vector<16x64xf32> -> vector<16x64xf32>
    %c0_15 = arith.constant 0 : index
    %c0_16 = arith.constant 0 : index
    %19 = vector.load %arg7[%c0_15, %c0_16] : memref<1x64xf32, #tpu.memory_space<vmem>>, vector<1x64xf32>
    %20 = vector.broadcast %19 : vector<1x64xf32> to vector<16x64xf32>
    %21 = arith.addf %18, %20 : vector<16x64xf32>
    %cst_17 = arith.constant 0.000000e+00 : f32
    %22 = vector.broadcast %cst_17 : f32 to vector<16x64xf32>
    %23 = arith.maximumf %21, %22 : vector<16x64xf32>
    %24 = arith.truncf %23 : vector<16x64xf32> to vector<16x64xbf16>
    %c0_18 = arith.constant 0 : index
    %c0_19 = arith.constant 0 : index
    %25 = vector.load %arg8[%c0_18, %c0_19] : memref<64x128xbf16, #tpu.memory_space<vmem>>, vector<64x128xbf16>
    %cst_20 = arith.constant dense<0.000000e+00> : vector<16x128xf32>
    %26 = tpu.matmul %24, %25, %cst_20 {dimension_numbers = #tpu.dot_dimension_numbers<[1], [0], [0], [1], [0, 0, 1, 1], [], []>} : vector<16x64xbf16>, vector<64x128xbf16>, vector<16x128xf32> -> vector<16x128xf32>
    %c0_21 = arith.constant 0 : index
    %c0_22 = arith.constant 0 : index
    %27 = vector.load %arg9[%c0_21, %c0_22] : memref<1x128xf32, #tpu.memory_space<vmem>>, vector<1x128xf32>
    %28 = vector.broadcast %27 : vector<1x128xf32> to vector<16x128xf32>
    %29 = arith.addf %26, %28 : vector<16x128xf32>
    %c0_23 = arith.constant 0 : index
    %c0_24 = arith.constant 0 : index
    %30 = vector.load %arg10[%c0_23, %c0_24] : memref<16x128xf32, #tpu.memory_space<vmem>>, vector<16x128xf32>
    tpu.vector_store %arg10[%c0_23, %c0_24], %29 {strides = array<i32>} : memref<16x128xf32, #tpu.memory_space<vmem>>, vector<16x128xf32>,
    return
  }
  func.func @transform_0(%arg0: i32) -> (i32, i32) {
    %c0_i32 = arith.constant 0 : i32
    %c0_i32_0 = arith.constant 0 : i32
    return %arg0, %c0_i32 : i32, i32
  }
  func.func @transform_1(%arg0: i32) -> (i32, i32) {
    %c0_i32 = arith.constant 0 : i32
    %c0_i32_0 = arith.constant 0 : i32
    %c0_i32_1 = arith.constant 0 : i32
    return %c0_i32, %c0_i32_0 : i32, i32
  }
  func.func @transform_2(%arg0: i32) -> (i32, i32) {
    %c0_i32 = arith.constant 0 : i32
    %c0_i32_0 = arith.constant 0 : i32
    %c0_i32_1 = arith.constant 0 : i32
    return %c0_i32, %c0_i32_0 : i32, i32
  }
  func.func @transform_3(%arg0: i32) -> (i32, i32) {
    %c0_i32 = arith.constant 0 : i32
    %c0_i32_0 = arith.constant 0 : i32
    %c0_i32_1 = arith.constant 0 : i32
    return %c0_i32, %c0_i32_0 : i32, i32
  }
  func.func @transform_4(%arg0: i32) -> (i32, i32) {
    %c0_i32 = arith.constant 0 : i32
    %c0_i32_0 = arith.constant 0 : i32
    %c0_i32_1 = arith.constant 0 : i32
    return %c0_i32, %c0_i32_0 : i32, i32
  }
  func.func @transform_5(%arg0: i32) -> (i32, i32) {
    %c0_i32 = arith.constant 0 : i32
    %c0_i32_0 = arith.constant 0 : i32
    %c0_i32_1 = arith.constant 0 : i32
    return %c0_i32, %c0_i32_0 : i32, i32
  }
  func.func @transform_6(%arg0: i32) -> (i32, i32) {
    %c0_i32 = arith.constant 0 : i32
    %c0_i32_0 = arith.constant 0 : i32
    %c0_i32_1 = arith.constant 0 : i32
    return %c0_i32, %c0_i32_0 : i32, i32
  }
  func.func @transform_7(%arg0: i32) -> (i32, i32) {
    %c0_i32 = arith.constant 0 : i32
    %c0_i32_0 = arith.constant 0 : i32
    %c0_i32_1 = arith.constant 0 : i32
    return %c0_i32, %c0_i32_0 : i32, i32
  }
  func.func @transform_8(%arg0: i32) -> (i32, i32) {
    %c0_i32 = arith.constant 0 : i32
    %c0_i32_0 = arith.constant 0 : i32
    %c0_i32_1 = arith.constant 0 : i32
    return %c0_i32, %c0_i32_0 : i32, i32
  }
  func.func @transform_9(%arg0: i32) -> (i32, i32) {
    %c0_i32 = arith.constant 0 : i32
    %c0_i32_0 = arith.constant 0 : i32
    return %arg0, %c0_i32 : i32, i32
  }
}

</mosaic_0001>

<llo_original>
// kernel: tpu_custom_call.1
$region0: #{tpu_custom_call.1}
  #allocation0 [shape = 'u32[]', space=smem, size = 0x4, offset = 0x4, fixed_abs, tag = 'smem constant byte address 0x4 - core index']
  #allocation1 [shape = 'u32[144,128]{1,0:T(1,128)}', space=vmem, size = 0x12000, scoped, tag = 'internal scratch']
  %s0 = inlined_call_operand.vmem [shape: bf16[16,32], index: 0, kind: input, shape index: {}]
  %s1 = inlined_call_operand.vmem [shape: bf16[32,128], index: 1, kind: input, shape index: {}]
  %s2 = inlined_call_operand.vmem [shape: f32[1,128], index: 2, kind: input, shape index: {}]
  %s3 = inlined_call_operand.vmem [shape: bf16[128,64], index: 3, kind: input, shape index: {}]
  %s4 = inlined_call_operand.vmem [shape: f32[1,64], index: 4, kind: input, shape index: {}]
  %s5 = inlined_call_operand.vmem [shape: bf16[64,64], index: 5, kind: input, shape index: {}]
  %s6 = inlined_call_operand.vmem [shape: f32[1,64], index: 6, kind: input, shape index: {}]
  %s7 = inlined_call_operand.vmem [shape: bf16[64,128], index: 7, kind: input, shape index: {}]
  %s8 = inlined_call_operand.vmem [shape: f32[1,128], index: 8, kind: input, shape index: {}]
  %s9 = inlined_call_operand.hbm [shape: f32[16,128], index: 9, kind: output, shape index: {}]
  %s10 = sld [smem:[#allocation0]]
  $region46: #{tpu_custom_call.1} parent=0
    _
  %s12 = ssub.s32 1, %s10
  %s13 = scalar_select 0, %s12, %s10
  $region1: #{tpu_custom_call.1} parent=0
    #allocation2 [shape = 'u8[8192]{0}', space=vmem, size = 0x2000, scoped, tag = 'output window, operand 0, single buffered']
    #allocation3 [shape = 's32[1]{0}', space=sflag, size = 0x4, scoped, tag = 'scoped memory for tpu_custom_call.1']
    %14 = vsyncpa [#allocation3], 0
    // Predicated region
    $region2: #{tpu_custom_call.1} parent=1 // pred_check
      _
    $region3: #{tpu_custom_call.1} parent=1 // pred_check_branch
      %16 = sbr.rel (0) target = $region5
    $region4: #{tpu_custom_call.1} parent=1 // pred_region
      _
    $region5: #{tpu_custom_call.1} parent=1 // pred_fallthru
      _
    // Predicated region
    $region6: #{tpu_custom_call.1} parent=1 // pred_check
      _
    $region7: #{tpu_custom_call.1} parent=1 // pred_check_branch
      %18 = sbr.rel (0) target = $region9
    $region8: #{tpu_custom_call.1} parent=1 // pred_region
      _
    $region9: #{tpu_custom_call.1} parent=1 // pred_fallthru
      _
    // Predicated region
    $region10: #{tpu_custom_call.1} parent=1 // pred_check
      _
    $region11: #{tpu_custom_call.1} parent=1 // pred_check_branch
      %20 = sbr.rel (0) target = $region13
    $region12: #{tpu_custom_call.1} parent=1 // pred_region
      _
    $region13: #{tpu_custom_call.1} parent=1 // pred_fallthru
      _
    // Predicated region
    $region14: #{tpu_custom_call.1} parent=1 // pred_check
      _
    $region15: #{tpu_custom_call.1} parent=1 // pred_check_branch
      %22 = sbr.rel (0) target = $region17
    $region16: #{tpu_custom_call.1} parent=1 // pred_region
      _
    $region17: #{tpu_custom_call.1} parent=1 // pred_fallthru
      _
    // Predicated region
    $region18: #{tpu_custom_call.1} parent=1 // pred_check
      _
    $region19: #{tpu_custom_call.1} parent=1 // pred_check_branch
      %24 = sbr.rel (0) target = $region21
    $region20: #{tpu_custom_call.1} parent=1 // pred_region
      _
    $region21: #{tpu_custom_call.1} parent=1 // pred_fallthru
      _
    // Predicated region
    $region22: #{tpu_custom_call.1} parent=1 // pred_check
      _
    $region23: #{tpu_custom_call.1} parent=1 // pred_check_branch
      %26 = sbr.rel (0) target = $region25
    $region24: #{tpu_custom_call.1} parent=1 // pred_region
      _
    $region25: #{tpu_custom_call.1} parent=1 // pred_fallthru
      _
    // Predicated region
    $region26: #{tpu_custom_call.1} parent=1 // pred_check
      _
    $region27: #{tpu_custom_call.1} parent=1 // pred_check_branch
      %28 = sbr.rel (0) target = $region29
    $region28: #{tpu_custom_call.1} parent=1 // pred_region
      _
    $region29: #{tpu_custom_call.1} parent=1 // pred_fallthru
      _
    // Predicated region
    $region30: #{tpu_custom_call.1} parent=1 // pred_check
      _
    $region31: #{tpu_custom_call.1} parent=1 // pred_check_branch
      %30 = sbr.rel (0) target = $region33
    $region32: #{tpu_custom_call.1} parent=1 // pred_region
      _
    $region33: #{tpu_custom_call.1} parent=1 // pred_fallthru
      _
    // Predicated region
    $region34: #{tpu_custom_call.1} parent=1 // pred_check
      _
    $region35: #{tpu_custom_call.1} parent=1 // pred_check_branch
      %32 = sbr.rel (0) target = $region37
    $region36: #{tpu_custom_call.1} parent=1 // pred_region
      _
    $region37: #{tpu_custom_call.1} parent=1 // pred_fallthru
      _
    %v34 = vld [vmem:[%s0] sm:$0xf]
    %v35 = vld [vmem:[%s0 + $0x4] sm:$0xf]
    %v36 = vld [vmem:[%s1] sm:$0xf]
    %v37 = vld [vmem:[%s1 + $0x4] sm:$0xf]
    %v38 = vld [vmem:[%s1 + $0x8] sm:$0xf]
    %v39 = vld [vmem:[%s1 + $0xc] sm:$0xf]
    %v40 = vld [vmem:[%s2] sm:$0x1]
    %v42 = vlaneseq
    %v43 = vshrl.u32 %v42, 7
    %v44 = vsub.s32 0, %v43
    %v45 = vrot.slane %v40, %v44
    %v49 = vunpack.c.l.b16 %v34
    %v50 = vunpack.c.l.b16 %v35
    %v51 = vpack.c.b16 %v50, %v49
    %v56 = vunpack.c.l.b16 %v36
    %v57 = vunpack.c.l.b16 %v37
    %v58 = vunpack.c.l.b16 %v38
    %v59 = vunpack.c.l.b16 %v39
    %v60 = vpack.c.b16 %v57, %v56
    %v61 = vpack.c.b16 %v59, %v58
    %vm64 = vcmask 261120
    %v66 = vsel %vm64, %v51, 0
    %68 = vmatprep.subr.bf16.mxu0 0
    %69 = vmatpush1.bf16.msra.mxu0 %v60
    %70 = vmatprep.subr.bf16.mxu0 0
    %71 = vmatpush1.bf16.msra.mxu0 %v61
    %72 = vmatprep.subr.bf16.mxu0 0
    %73 = vmatpush1.bf16.msra.mxu0 0
    %74 = vmatprep.subr.bf16.mxu0 0
    %75 = vmatpush1.bf16.msra.mxu0 0
    %76 = vmatprep.subr.bf16.mxu0 0
    %77 = vmatpush1.bf16.msra.mxu0 0
    %78 = vmatprep.subr.bf16.mxu0 0
    %79 = vmatpush1.bf16.msra.mxu0 0
    %80 = vmatprep.subr.bf16.mxu0 0
    %81 = vmatpush1.bf16.msra.mxu0 0
    %82 = vmatprep.subr.bf16.mxu0 0
    %83 = vmatpush1.bf16.msra.mxu0 0
    %84 = vmatprep.subr.bf16.mxu0 0
    %85 = vmatpush1.bf16.msra.mxu0 0
    %86 = vmatprep.subr.bf16.mxu0 0
    %87 = vmatpush1.bf16.msra.mxu0 0
    %88 = vmatprep.subr.bf16.mxu0 0
    %89 = vmatpush1.bf16.msra.mxu0 0
    %90 = vmatprep.subr.bf16.mxu0 0
    %91 = vmatpush1.bf16.msra.mxu0 0
    %92 = vmatprep.subr.bf16.mxu0 0
    %93 = vmatpush1.bf16.msra.mxu0 0
    %94 = vmatprep.subr.bf16.mxu0 0
    %95 = vmatpush1.bf16.msra.mxu0 0
    %96 = vmatprep.subr.bf16.mxu0 0
    %97 = vmatpush1.bf16.msra.mxu0 0
    %98 = vmatprep.subr.bf16.mxu0 0
    %99 = vmatpush1.bf16.msra.mxu0 0
    %100 = vmatprep.mubr.bf16.mxu0 0
    %101 = vmatmul.mubr.bf16.gmra.mrb[0].mxu0 %v66
    %v102 = vpop.f32.mrb[0].mxu0
    %v103 = vadd.f32 %v45, %v102
    %v104 = vpop.f32.mrb[0].mxu0
    %v105 = vpop.f32.mrb[0].mxu0
    %v106 = vadd.f32 %v45, %v105
    %v107 = vpop.f32.mrb[0].mxu0
    %108 = vdwg.mxu0
    %v109 = vmax.f32 %v103, 0.0
    %v110 = vmax.f32 %v106, 0.0
    %v111 = vpack.c.bf16 %v110, %v109
    %v112 = vld [vmem:[%s3] sm:$0xf]
    %v113 = vld [vmem:[%s3 + $0x4] sm:$0xf]
    %v114 = vld [vmem:[%s3 + $0x8] sm:$0xf]
    %v115 = vld [vmem:[%s3 + $0xc] sm:$0xf]
    %v116 = vld [vmem:[%s3 + $0x10] sm:$0xf]
    %v117 = vld [vmem:[%s3 + $0x14] sm:$0xf]
    %v118 = vld [vmem:[%s3 + $0x18] sm:$0xf]
    %v119 = vld [vmem:[%s3 + $0x1c] sm:$0xf]
    %v120 = vld [vmem:[%s3 + $0x20] sm:$0xf]
    %v121 = vld [vmem:[%s3 + $0x24] sm:$0xf]
    %v122 = vld [vmem:[%s3 + $0x28] sm:$0xf]
    %v123 = vld [vmem:[%s3 + $0x2c] sm:$0xf]
    %v124 = vld [vmem:[%s3 + $0x30] sm:$0xf]
    %v125 = vld [vmem:[%s3 + $0x34] sm:$0xf]
    %v126 = vld [vmem:[%s3 + $0x38] sm:$0xf]
    %v127 = vld [vmem:[%s3 + $0x3c] sm:$0xf]
    %v128 = vld [vmem:[%s4] sm:$0x1]
    %v130 = vlaneseq
    %v131 = vshrl.u32 %v130, 7
    %v132 = vsub.s32 0, %v131
    %v133 = vrot.slane %v128, %v132
    %v151 = vunpack.c.l.b16 %v112
    %v152 = vunpack.c.l.b16 %v113
    %v153 = vunpack.c.l.b16 %v114
    %v154 = vunpack.c.l.b16 %v115
    %v155 = vunpack.c.l.b16 %v116
    %v156 = vunpack.c.l.b16 %v117
    %v157 = vunpack.c.l.b16 %v118
    %v158 = vunpack.c.l.b16 %v119
    %v159 = vunpack.c.l.b16 %v120
    %v160 = vunpack.c.l.b16 %v121
    %v161 = vunpack.c.l.b16 %v122
    %v162 = vunpack.c.l.b16 %v123
    %v163 = vunpack.c.l.b16 %v124
    %v164 = vunpack.c.l.b16 %v125
    %v165 = vunpack.c.l.b16 %v126
    %v166 = vunpack.c.l.b16 %v127
    %v167 = vpack.c.b16 %v152, %v151
    %v168 = vpack.c.b16 %v154, %v153
    %v169 = vpack.c.b16 %v156, %v155
    %v170 = vpack.c.b16 %v158, %v157
    %v171 = vpack.c.b16 %v160, %v159
    %v172 = vpack.c.b16 %v162, %v161
    %v173 = vpack.c.b16 %v164, %v163
    %v174 = vpack.c.b16 %v166, %v165
    %183 = vmatprep.subr.bf16.mxu0 0
    %184 = vmatpush1.bf16.msra.mxu0 %v167
    %185 = vmatprep.subr.bf16.mxu0 0
    %186 = vmatpush1.bf16.msra.mxu0 %v168
    %187 = vmatprep.subr.bf16.mxu0 0
    %188 = vmatpush1.bf16.msra.mxu0 %v169
    %189 = vmatprep.subr.bf16.mxu0 0
    %190 = vmatpush1.bf16.msra.mxu0 %v170
    %191 = vmatprep.subr.bf16.mxu0 0
    %192 = vmatpush1.bf16.msra.mxu0 %v171
    %193 = vmatprep.subr.bf16.mxu0 0
    %194 = vmatpush1.bf16.msra.mxu0 %v172
    %195 = vmatprep.subr.bf16.mxu0 0
    %196 = vmatpush1.bf16.msra.mxu0 %v173
    %197 = vmatprep.subr.bf16.mxu0 0
    %198 = vmatpush1.bf16.msra.mxu0 %v174
    %199 = vmatprep.subr.bf16.mxu0 0
    %200 = vmatpush1.bf16.msra.mxu0 0
    %201 = vmatprep.subr.bf16.mxu0 0
    %202 = vmatpush1.bf16.msra.mxu0 0
    %203 = vmatprep.subr.bf16.mxu0 0
    %204 = vmatpush1.bf16.msra.mxu0 0
    %205 = vmatprep.subr.bf16.mxu0 0
    %206 = vmatpush1.bf16.msra.mxu0 0
    %207 = vmatprep.subr.bf16.mxu0 0
    %208 = vmatpush1.bf16.msra.mxu0 0
    %209 = vmatprep.subr.bf16.mxu0 0
    %210 = vmatpush1.bf16.msra.mxu0 0
    %211 = vmatprep.subr.bf16.mxu0 0
    %212 = vmatpush1.bf16.msra.mxu0 0
    %213 = vmatprep.subr.bf16.mxu0 0
    %214 = vmatpush1.bf16.msra.mxu0 0
    %215 = vmatprep.mubr.bf16.mxu0 0
    %216 = vmatmul.mubr.bf16.gmra.mrb[0].mxu0 %v111
    %v217 = vpop.f32.mrb[0].mxu0
    %v218 = vadd.f32 %v133, %v217
    %v219 = vpop.f32.mrb[0].mxu0
    %v220 = vpop.f32.mrb[0].mxu0
    %v221 = vadd.f32 %v133, %v220
    %v222 = vpop.f32.mrb[0].mxu0
    %223 = vdwg.mxu0
    %v224 = vmax.f32 %v218, 0.0
    %v225 = vmax.f32 %v221, 0.0
    %v226 = vpack.c.bf16 %v225, %v224
    %v227 = vld [vmem:[%s5] sm:$0xf]
    %v228 = vld [vmem:[%s5 + $0x4] sm:$0xf]
    %v229 = vld [vmem:[%s5 + $0x8] sm:$0xf]
    %v230 = vld [vmem:[%s5 + $0xc] sm:$0xf]
    %v231 = vld [vmem:[%s5 + $0x10] sm:$0xf]
    %v232 = vld [vmem:[%s5 + $0x14] sm:$0xf]
    %v233 = vld [vmem:[%s5 + $0x18] sm:$0xf]
    %v234 = vld [vmem:[%s5 + $0x1c] sm:$0xf]
    %v235 = vld [vmem:[%s6] sm:$0x1]
    %v237 = vlaneseq
    %v238 = vshrl.u32 %v237, 7
    %v239 = vsub.s32 0, %v238
    %v240 = vrot.slane %v235, %v239
    %v250 = vunpack.c.l.b16 %v227
    %v251 = vunpack.c.l.b16 %v228
    %v252 = vunpack.c.l.b16 %v229
    %v253 = vunpack.c.l.b16 %v230
    %v254 = vunpack.c.l.b16 %v231
    %v255 = vunpack.c.l.b16 %v232
    %v256 = vunpack.c.l.b16 %v233
    %v257 = vunpack.c.l.b16 %v234
    %v258 = vpack.c.b16 %v251, %v250
    %v259 = vpack.c.b16 %v253, %v252
    %v260 = vpack.c.b16 %v255, %v254
    %v261 = vpack.c.b16 %v257, %v256
    %vm266 = vcmask 523264
    %v268 = vsel %vm266, %v226, 0
    %270 = vmatprep.subr.bf16.mxu0 0
    %271 = vmatpush1.bf16.msra.mxu0 %v258
    %272 = vmatprep.subr.bf16.mxu0 0
    %273 = vmatpush1.bf16.msra.mxu0 %v259
    %274 = vmatprep.subr.bf16.mxu0 0
    %275 = vmatpush1.bf16.msra.mxu0 %v260
    %276 = vmatprep.subr.bf16.mxu0 0
    %277 = vmatpush1.bf16.msra.mxu0 %v261
    %278 = vmatprep.subr.bf16.mxu0 0
    %279 = vmatpush1.bf16.msra.mxu0 0
    %280 = vmatprep.subr.bf16.mxu0 0
    %281 = vmatpush1.bf16.msra.mxu0 0
    %282 = vmatprep.subr.bf16.mxu0 0
    %283 = vmatpush1.bf16.msra.mxu0 0
    %284 = vmatprep.subr.bf16.mxu0 0
    %285 = vmatpush1.bf16.msra.mxu0 0
    %286 = vmatprep.subr.bf16.mxu0 0
    %287 = vmatpush1.bf16.msra.mxu0 0
    %288 = vmatprep.subr.bf16.mxu0 0
    %289 = vmatpush1.bf16.msra.mxu0 0
    %290 = vmatprep.subr.bf16.mxu0 0
    %291 = vmatpush1.bf16.msra.mxu0 0
    %292 = vmatprep.subr.bf16.mxu0 0
    %293 = vmatpush1.bf16.msra.mxu0 0
    %294 = vmatprep.subr.bf16.mxu0 0
    %295 = vmatpush1.bf16.msra.mxu0 0
    %296 = vmatprep.subr.bf16.mxu0 0
    %297 = vmatpush1.bf16.msra.mxu0 0
    %298 = vmatprep.subr.bf16.mxu0 0
    %299 = vmatpush1.bf16.msra.mxu0 0
    %300 = vmatprep.subr.bf16.mxu0 0
    %301 = vmatpush1.bf16.msra.mxu0 0
    %302 = vmatprep.mubr.bf16.mxu0 0
    %303 = vmatmul.mubr.bf16.gmra.mrb[0].mxu0 %v268
    %v304 = vpop.f32.mrb[0].mxu0
    %v305 = vadd.f32 %v240, %v304
    %v306 = vpop.f32.mrb[0].mxu0
    %v307 = vpop.f32.mrb[0].mxu0
    %v308 = vadd.f32 %v240, %v307
    %v309 = vpop.f32.mrb[0].mxu0
    %310 = vdwg.mxu0
    %v311 = vmax.f32 %v305, 0.0
    %v312 = vmax.f32 %v308, 0.0
    %v313 = vpack.c.bf16 %v312, %v311
    %v314 = vld [vmem:[%s7] sm:$0xf]
    %v315 = vld [vmem:[%s7 + $0x4] sm:$0xf]
    %v316 = vld [vmem:[%s7 + $0x8] sm:$0xf]
    %v317 = vld [vmem:[%s7 + $0xc] sm:$0xf]
    %v318 = vld [vmem:[%s7 + $0x10] sm:$0xf]
    %v319 = vld [vmem:[%s7 + $0x14] sm:$0xf]
    %v320 = vld [vmem:[%s7 + $0x18] sm:$0xf]
    %v321 = vld [vmem:[%s7 + $0x1c] sm:$0xf]
    %v322 = vld [vmem:[%s8] sm:$0x1]
    %v324 = vlaneseq
    %v325 = vshrl.u32 %v324, 7
    %v326 = vsub.s32 0, %v325
    %v327 = vrot.slane %v322, %v326
    %v337 = vunpack.c.l.b16 %v314
    %v338 = vunpack.c.l.b16 %v315
    %v339 = vunpack.c.l.b16 %v316
    %v340 = vunpack.c.l.b16 %v317
    %v341 = vunpack.c.l.b16 %v318
    %v342 = vunpack.c.l.b16 %v319
    %v343 = vunpack.c.l.b16 %v320
    %v344 = vunpack.c.l.b16 %v321
    %v345 = vpack.c.b16 %v338, %v337
    %v346 = vpack.c.b16 %v340, %v339
    %v347 = vpack.c.b16 %v342, %v341
    %v348 = vpack.c.b16 %v344, %v343
    %v354 = vsel %vm266, %v313, 0
    %356 = vmatprep.subr.bf16.mxu0 0
    %357 = vmatpush1.bf16.msra.mxu0 %v345
    %358 = vmatprep.subr.bf16.mxu0 0
    %359 = vmatpush1.bf16.msra.mxu0 %v346
    %360 = vmatprep.subr.bf16.mxu0 0
    %361 = vmatpush1.bf16.msra.mxu0 %v347
    %362 = vmatprep.subr.bf16.mxu0 0
    %363 = vmatpush1.bf16.msra.mxu0 %v348
    %364 = vmatprep.subr.bf16.mxu0 0
    %365 = vmatpush1.bf16.msra.mxu0 0
    %366 = vmatprep.subr.bf16.mxu0 0
    %367 = vmatpush1.bf16.msra.mxu0 0
    %368 = vmatprep.subr.bf16.mxu0 0
    %369 = vmatpush1.bf16.msra.mxu0 0
    %370 = vmatprep.subr.bf16.mxu0 0
    %371 = vmatpush1.bf16.msra.mxu0 0
    %372 = vmatprep.subr.bf16.mxu0 0
    %373 = vmatpush1.bf16.msra.mxu0 0
    %374 = vmatprep.subr.bf16.mxu0 0
    %375 = vmatpush1.bf16.msra.mxu0 0
    %376 = vmatprep.subr.bf16.mxu0 0
    %377 = vmatpush1.bf16.msra.mxu0 0
    %378 = vmatprep.subr.bf16.mxu0 0
    %379 = vmatpush1.bf16.msra.mxu0 0
    %380 = vmatprep.subr.bf16.mxu0 0
    %381 = vmatpush1.bf16.msra.mxu0 0
    %382 = vmatprep.subr.bf16.mxu0 0
    %383 = vmatpush1.bf16.msra.mxu0 0
    %384 = vmatprep.subr.bf16.mxu0 0
    %385 = vmatpush1.bf16.msra.mxu0 0
    %386 = vmatprep.subr.bf16.mxu0 0
    %387 = vmatpush1.bf16.msra.mxu0 0
    %388 = vmatprep.mubr.bf16.mxu0 0
    %389 = vmatmul.mubr.bf16.gmra.mrb[0].mxu0 %v354
    %v390 = vpop.f32.mrb[0].mxu0
    %v391 = vadd.f32 %v327, %v390
    %v392 = vpop.f32.mrb[0].mxu0
    %v393 = vpop.f32.mrb[0].mxu0
    %v394 = vadd.f32 %v327, %v393
    %v395 = vpop.f32.mrb[0].mxu0
    %396 = vdwg.mxu0
    %397 = vst [vmem:[#allocation2] sm:$0xff] %v391
    %398 = vst [vmem:[#allocation2 + $0x8] sm:$0xff] %v394
    // Predicated region
    $region38: #{tpu_custom_call.1} parent=1 // pred_check
      _
    $region39: #{tpu_custom_call.1} parent=1 // pred_check_branch
      %400 = sbr.rel (0) target = $region41
    $region40: #{tpu_custom_call.1} parent=1 // pred_region
      %s402 = ssub.s32 256, 256
      %403 = vsyncadd [#allocation3], %s402
      %s404 = sshll.u32 [#allocation2], 4
      %s405 = int_to_ptr.vmem [resolvable:$true] %s404
      %410 = dma.vmem_to_hbm [thread:$0]  %s405, 256, %s9, [#allocation3], 128, 128, 8
    $region41: #{tpu_custom_call.1} parent=1 // pred_fallthru
      _
    // Predicated region
    $region42: #{tpu_custom_call.1} parent=1 // pred_check
      _
    $region43: #{tpu_custom_call.1} parent=1 // pred_check_branch
      %412 = sbr.rel (0) target = $region45
    $region44: #{tpu_custom_call.1} parent=1 // pred_region
      %413 = dma.done [#allocation3], 256
    $region45: #{tpu_custom_call.1} parent=1 // pred_fallthru
      _
    %414 = vsyncpa [#allocation3], 1

</llo_original>
